<compile_context>
chip_gen: v7x
topology: tpu7x:2x2x1
jax: 0.10.0
libtpu: 0.0.40
codegen_flags: <defaults>
</compile_context>

<pallas_src>
import jax
import jax.numpy as jnp
from jax.experimental import pallas as pl
from jax.experimental.pallas import tpu as pltpu


def _fused_conv_kernel(x_ref, w1_ref, w2_ref, b1_ref, b2_ref, o_ref):
    # x_ref:  (Cin, TP)     channel-major pixels (lane-dense)
    # w*_ref: (Cout, Cin)   1x1-conv weights
    # b*_ref: (Cout, 1)     biases
    # o_ref:  (Cout, TP)
    x = x_ref[...]
    # Fold the positive scalars into the tiny weight/bias operands
    # (relu(6z) = 6 relu(z)); the wide result never gets an extra multiply.
    y1 = jnp.dot(w1_ref[...] * 6.0, x,
                 preferred_element_type=jnp.float32) + 6.0 * b1_ref[...]
    y2 = jnp.dot(w2_ref[...] * 4.0, x,
                 preferred_element_type=jnp.float32) + 4.0 * b2_ref[...]
    o_ref[...] = jnp.maximum(y1, 0.0) + jnp.maximum(y2, 0.0)


def _fused_conv(x_flat, w1, w2, b1, b2, *, max_pixels_per_block=65536):
    """x_flat: (N, Cin, P) f32; w*: (Cout, Cin); b*: (Cout, 1) -> (N, Cout, P)."""
    N, Cin, P = x_flat.shape
    Cout = w1.shape[0]

    if P <= max_pixels_per_block:
        tp = P                       # single lane-dense block per image
        grid_p = 1
    else:
        tp = max_pixels_per_block    # multiple of 128; partial tail block OK
        grid_p = pl.cdiv(P, tp)

    # Advisory cost: two (Cout,Cin)x(Cin,P) matmuls + elementwise combine.
    flops = 4 * N * Cout * Cin * P + 4 * N * Cout * P
    bytes_accessed = 4 * (N * Cin * P + N * Cout * P + 2 * Cout * Cin + 2 * Cout)

    return pl.pallas_call(
        _fused_conv_kernel,
        out_shape=jax.ShapeDtypeStruct((N, Cout, P), jnp.float32),
        grid=(N, grid_p),
        in_specs=[
            pl.BlockSpec((None, Cin, tp), lambda n, p: (n, 0, p)),
            pl.BlockSpec((Cout, Cin), lambda n, p: (0, 0)),
            pl.BlockSpec((Cout, Cin), lambda n, p: (0, 0)),
            pl.BlockSpec((Cout, 1), lambda n, p: (0, 0)),
            pl.BlockSpec((Cout, 1), lambda n, p: (0, 0)),
        ],
        out_specs=pl.BlockSpec((None, Cout, tp), lambda n, p: (n, 0, p)),
        compiler_params=pltpu.CompilerParams(
            dimension_semantics=("parallel", "parallel"),
            # Let XLA fuse the jnp.pad + reshape producer straight into the
            # padded-input operand (no standalone HBM copy of the padded x).
            allow_input_fusion=[True, False, False, False, False],
        ),
        cost_estimate=pl.CostEstimate(
            flops=flops, transcendentals=0, bytes_accessed=bytes_accessed),
    )(x_flat, w1, w2, b1, b2)


@jax.jit
def model_forward(x_nchw, w1, b1, w2, b2):
    """Reproduces Model.forward.

    x_nchw: (N, 3, H, W) f32 (NCHW); w*: (Cout, Cin, 1, 1); b*: (Cout,)
    returns: (N, Cout, H+2, W+2) f32
    """
    N, Cin, H, W = x_nchw.shape
    Cout = w1.shape[0]
    Hp, Wp = H + 2, W + 2

    # Zero-pad the input spatially: a 1x1 conv of the padded input equals the
    # padded conv output (border becomes bias-only automatically).  This pad
    # is fused into the pallas_call operand via allow_input_fusion.
    xp = jnp.pad(x_nchw, ((0, 0), (0, 0), (1, 1), (1, 1)))
    x_flat = xp.reshape(N, Cin, Hp * Wp)          # free reshape, channel-major

    # Free (layout-preserving) reshapes of the tiny parameters.
    w1f = w1.reshape(Cout, Cin)
    w2f = w2.reshape(Cout, Cin)
    b1f = b1.reshape(Cout, 1)
    b2f = b2.reshape(Cout, 1)

    out_flat = _fused_conv(x_flat, w1f, w2f, b1f, b2f)   # (N, Cout, Hp*Wp)
    return out_flat.reshape(N, Cout, Hp, Wp)             # free reshape back


def _reference_forward(x_nchw, w1, b1, w2, b2):
    """Pure-JAX reference (lax conv) matching the original PyTorch composition."""
    dn = jax.lax.conv_dimension_numbers(x_nchw.shape, w1.shape,
                                        ("NCHW", "OIHW", "NCHW"))

    def conv(x, w, bias):
        y = jax.lax.conv_general_dilated(x, w, (1, 1), [(1, 1), (1, 1)],
                                         dimension_numbers=dn)
        return y + bias[None, :, None, None]

    y1 = conv(x_nchw, w1, b1)
    y2 = conv(x_nchw, w2, b2)
    return 3.0 * jax.nn.relu(2.0 * y1) + 2.0 * jax.nn.relu(2.0 * y2)


if __name__ == "__main__":
    key = jax.random.PRNGKey(0)
    kx, kw1, kb1, kw2, kb2 = jax.random.split(key, 5)

    # Small shapes consistent with the module (Cin=3, Cout=8, 1x1 conv, pad=1).
    N, Cin, H, W = 2, 3, 32, 32
    Cout = 8

    x = jax.random.normal(kx, (N, Cin, H, W), dtype=jnp.float32)
    w1 = jax.random.normal(kw1, (Cout, Cin, 1, 1), dtype=jnp.float32) * 0.1
    b1 = jax.random.normal(kb1, (Cout,), dtype=jnp.float32) * 0.1
    w2 = jax.random.normal(kw2, (Cout, Cin, 1, 1), dtype=jnp.float32) * 0.1
    b2 = jax.random.normal(kb2, (Cout,), dtype=jnp.float32) * 0.1

    out = jax.block_until_ready(model_forward(x, w1, b1, w2, b2))

    ref = _reference_forward(x, w1, b1, w2, b2)
    assert out.shape == (N, Cout, H + 2, W + 2), out.shape
    assert jnp.allclose(out, ref, atol=1e-4, rtol=1e-4), "mismatch vs reference"

    print("KERNEL_OK")
</pallas_src>

<mosaic_0001>
module attributes {stable_mosaic.version = 11 : i64} {
  func.func @_fused_conv_kernel(%arg0: i32, %arg1: i32, %arg2: memref<1x3x1156xf32, #tpu.memory_space<vmem>>, %arg3: memref<8x3xf32, #tpu.memory_space<vmem>>, %arg4: memref<8x3xf32, #tpu.memory_space<vmem>>, %arg5: memref<8x1xf32, #tpu.memory_space<vmem>>, %arg6: memref<8x1xf32, #tpu.memory_space<vmem>>, %arg7: memref<1x8x1156xf32, #tpu.memory_space<vmem>>) attributes {dimension_semantics = [#tpu.dimension_semantics<parallel>, #tpu.dimension_semantics<parallel>], iteration_bounds = array<i64: 2, 1>, scalar_prefetch = 0 : i64, scratch_operands = 0 : i64, tpu.core_type = #tpu.core_type<tc>, window_params = [{transform_indices = @transform_0, window_bounds = array<i64: 1, 3, 1156>}, {pipeline_mode = #tpu.pipeline_mode<synchronous>, transform_indices = @transform_1, window_bounds = array<i64: 8, 3>}, {pipeline_mode = #tpu.pipeline_mode<synchronous>, transform_indices = @transform_2, window_bounds = array<i64: 8, 3>}, {pipeline_mode = #tpu.pipeline_mode<synchronous>, transform_indices = @transform_3, window_bounds = array<i64: 8, 1>}, {pipeline_mode = #tpu.pipeline_mode<synchronous>, transform_indices = @transform_4, window_bounds = array<i64: 8, 1>}, {transform_indices = @transform_5, window_bounds = array<i64: 1, 8, 1156>}]} {
    %c0 = arith.constant 0 : index
    %c0_0 = arith.constant 0 : index
    %c0_1 = arith.constant 0 : index
    %0 = vector.load %arg2[%c0, %c0_0, %c0_1] : memref<1x3x1156xf32, #tpu.memory_space<vmem>>, vector<1x3x1156xf32>
    %1 = vector.shape_cast %0 : vector<1x3x1156xf32> to vector<3x1156xf32>
    %c0_2 = arith.constant 0 : index
    %c0_3 = arith.constant 0 : index
    %2 = vector.load %arg3[%c0_2, %c0_3] : memref<8x3xf32, #tpu.memory_space<vmem>>, vector<8x3xf32>
    %cst = arith.constant 6.000000e+00 : f32
    %3 = vector.broadcast %cst : f32 to vector<8x3xf32>
    %4 = arith.mulf %2, %3 : vector<8x3xf32>
    %cst_4 = arith.constant dense<0.000000e+00> : vector<8x1156xf32>
    %5 = tpu.matmul %4, %1, %cst_4 {dimension_numbers = #tpu.dot_dimension_numbers<[1], [0], [0], [1], [0, 0, 1, 1], [], []>} : vector<8x3xf32>, vector<3x1156xf32>, vector<8x1156xf32> -> vector<8x1156xf32>
    %c0_5 = arith.constant 0 : index
    %c0_6 = arith.constant 0 : index
    %6 = vector.load %arg5[%c0_5, %c0_6] : memref<8x1xf32, #tpu.memory_space<vmem>>, vector<8x1xf32>
    %cst_7 = arith.constant 6.000000e+00 : f32
    %7 = vector.broadcast %cst_7 : f32 to vector<8x1xf32>
    %8 = arith.mulf %7, %6 : vector<8x1xf32>
    %9 = vector.broadcast %8 : vector<8x1xf32> to vector<8x1156xf32>
    %10 = arith.addf %5, %9 : vector<8x1156xf32>
    %c0_8 = arith.constant 0 : index
    %c0_9 = arith.constant 0 : index
    %11 = vector.load %arg4[%c0_8, %c0_9] : memref<8x3xf32, #tpu.memory_space<vmem>>, vector<8x3xf32>
    %cst_10 = arith.constant 4.000000e+00 : f32
    %12 = vector.broadcast %cst_10 : f32 to vector<8x3xf32>
    %13 = arith.mulf %11, %12 : vector<8x3xf32>
    %cst_11 = arith.constant dense<0.000000e+00> : vector<8x1156xf32>
    %14 = tpu.matmul %13, %1, %cst_11 {dimension_numbers = #tpu.dot_dimension_numbers<[1], [0], [0], [1], [0, 0, 1, 1], [], []>} : vector<8x3xf32>, vector<3x1156xf32>, vector<8x1156xf32> -> vector<8x1156xf32>
    %c0_12 = arith.constant 0 : index
    %c0_13 = arith.constant 0 : index
    %15 = vector.load %arg6[%c0_12, %c0_13] : memref<8x1xf32, #tpu.memory_space<vmem>>, vector<8x1xf32>
    %cst_14 = arith.constant 4.000000e+00 : f32
    %16 = vector.broadcast %cst_14 : f32 to vector<8x1xf32>
    %17 = arith.mulf %16, %15 : vector<8x1xf32>
    %18 = vector.broadcast %17 : vector<8x1xf32> to vector<8x1156xf32>
    %19 = arith.addf %14, %18 : vector<8x1156xf32>
    %cst_15 = arith.constant 0.000000e+00 : f32
    %20 = vector.broadcast %cst_15 : f32 to vector<8x1156xf32>
    %21 = arith.maximumf %10, %20 : vector<8x1156xf32>
    %cst_16 = arith.constant 0.000000e+00 : f32
    %22 = vector.broadcast %cst_16 : f32 to vector<8x1156xf32>
    %23 = arith.maximumf %19, %22 : vector<8x1156xf32>
    %24 = arith.addf %21, %23 : vector<8x1156xf32>
    %c0_17 = arith.constant 0 : index
    %c0_18 = arith.constant 0 : index
    %c0_19 = arith.constant 0 : index
    %25 = vector.load %arg7[%c0_17, %c0_18, %c0_19] : memref<1x8x1156xf32, #tpu.memory_space<vmem>>, vector<1x8x1156xf32>
    %26 = vector.shape_cast %25 : vector<1x8x1156xf32> to vector<8x1156xf32>
    %27 = vector.shape_cast %24 : vector<8x1156xf32> to vector<1x8x1156xf32>
    tpu.vector_store %arg7[%c0_17, %c0_18, %c0_19], %27 {strides = array<i32>} : memref<1x8x1156xf32, #tpu.memory_space<vmem>>, vector<1x8x1156xf32>,
    return
  }
  func.func @transform_0(%arg0: i32, %arg1: i32) -> (i32, i32, i32) {
    %c0_i32 = arith.constant 0 : i32
    %c0_i32_0 = arith.constant 0 : i32
    return %arg0, %c0_i32, %arg1 : i32, i32, i32
  }
  func.func @transform_1(%arg0: i32, %arg1: i32) -> (i32, i32) {
    %c0_i32 = arith.constant 0 : i32
    %c0_i32_0 = arith.constant 0 : i32
    %c0_i32_1 = arith.constant 0 : i32
    return %c0_i32, %c0_i32_0 : i32, i32
  }
  func.func @transform_2(%arg0: i32, %arg1: i32) -> (i32, i32) {
    %c0_i32 = arith.constant 0 : i32
    %c0_i32_0 = arith.constant 0 : i32
    %c0_i32_1 = arith.constant 0 : i32
    return %c0_i32, %c0_i32_0 : i32, i32
  }
  func.func @transform_3(%arg0: i32, %arg1: i32) -> (i32, i32) {
    %c0_i32 = arith.constant 0 : i32
    %c0_i32_0 = arith.constant 0 : i32
    %c0_i32_1 = arith.constant 0 : i32
    return %c0_i32, %c0_i32_0 : i32, i32
  }
  func.func @transform_4(%arg0: i32, %arg1: i32) -> (i32, i32) {
    %c0_i32 = arith.constant 0 : i32
    %c0_i32_0 = arith.constant 0 : i32
    %c0_i32_1 = arith.constant 0 : i32
    return %c0_i32, %c0_i32_0 : i32, i32
  }
  func.func @transform_5(%arg0: i32, %arg1: i32) -> (i32, i32, i32) {
    %c0_i32 = arith.constant 0 : i32
    %c0_i32_0 = arith.constant 0 : i32
    return %arg0, %c0_i32, %arg1 : i32, i32, i32
  }
}

</mosaic_0001>

<llo_original>
// kernel: model_forward.1
$region0: #{model_forward.1}
  #allocation0 [shape = 'u32[]', space=smem, size = 0x4, offset = 0x4, fixed_abs, tag = 'smem constant byte address 0x4 - core index']
  #allocation1 [shape = 'u32[144,128]{1,0:T(1,128)}', space=vmem, size = 0x12000, scoped, tag = 'internal scratch']
  %s0 = inlined_call_operand.vmem [shape: f32[2,3,1156], index: 0, kind: input, shape index: {}]
  %s1 = inlined_call_operand.vmem [shape: f32[8,3], index: 1, kind: input, shape index: {}]
  %s2 = inlined_call_operand.vmem [shape: f32[8,3], index: 2, kind: input, shape index: {}]
  %s3 = inlined_call_operand.vmem [shape: f32[8,1], index: 3, kind: input, shape index: {}]
  %s4 = inlined_call_operand.vmem [shape: f32[8,1], index: 4, kind: input, shape index: {}]
  %s5 = inlined_call_operand.vmem [shape: f32[2,8,1156], index: 5, kind: output, shape index: {}]
  %s6 = sld [smem:[#allocation0]]
  $region53: #{model_forward.1} parent=0
    _
  %s8 = ssub.s32 1, %s6
  %s9 = scalar_select 0, %s8, %s6
  loop: start=0, step=1, limit=4
  $region2: #{model_forward.1} parent=0 // loop_pre_header
    _
  $region3: #{model_forward.1} parent=0 // loop_header
    %s11 = sphi 0, %s15
    %p12 = scmp.ge.s32.totalorder %s11, 4
    %s18 = sphi 0, %s30
    %s19 = sphi 0, %s26
    %s20 = sphi 0, %s18
    %s21 = sphi 0, %s19
    %s22 = sphi 0, %s20
    %s23 = sphi 0, %s21
    %s35 = sphi 0, %s37
    %s38 = sphi 0, %s35
    %s39 = sphi 0, %s38
    %s55 = sphi 0, %s39
    %s59 = sphi 0, %s59
    %s61 = sphi 0, %s59
    %s62 = sphi 0, %s61
    %s76 = sphi 0, %s62
    %s80 = sphi 0, %s80
    %s82 = sphi 0, %s80
    %s83 = sphi 0, %s82
    %s97 = sphi 0, %s83
    %s101 = sphi 0, %s101
    %s103 = sphi 0, %s101
    %s104 = sphi 0, %s103
    %s118 = sphi 0, %s104
    %s122 = sphi 0, %s122
    %s124 = sphi 0, %s122
    %s125 = sphi 0, %s124
    %s139 = sphi 0, %s125
    %s147 = sphi 0, %s149
    %s150 = sphi 0, %s147
    %s151 = sphi 0, %s150
    %s167 = sphi 0, %s151
  $region4: #{model_forward.1} parent=0 // loop_header_branch
    %14 = sbr.rel (%p12) target = $region8
  $region5: #{model_forward.1} parent=0 // loop_body
    %s16 = ssub.s32 %s11, 1
    %s17 = ssub.s32 %s11, 2
    %s24 = sadd.s32 1, %s19
    %p25 = scmp.ge.s32.totalorder %s24, 1
    %s26 = scalar_select %p25, 0, %s24
    %s27 = sadd.s32 1, %s18
    %s28 = scalar_select %p25, %s27, %s18
    %p29 = scmp.ge.s32.totalorder %s28, 2
    %s30 = scalar_select %p29, 0, %s28
    %s31 = ssub.s32 %s18, %s30
    %s32 = ssub.s32 %s19, %s26
    %s33 = sor.u32 %s31, %s32
    %p34 = scmp.eq.s32.totalorder %s33, 0
    %s36 = sadd.s32 %s35, 1
    %s37 = scalar_select %p34, %s35, %s36
    %p40 = pneg %p34
    %p41 = scmp.eq.s32.totalorder %s11, 1
    %p42 = por %p40, %p41
    %p43 = scmp.ne.s32.totalorder %s35, %s38
    %p44 = scmp.eq.s32.totalorder %s11, 0
    %p45 = por %p43, %p44
    %p46 = scmp.ne.s32.totalorder %s35, %s38
    %p47 = scmp.eq.s32.totalorder %s16, 1
    %p48 = por %p46, %p47
    %p49 = scmp.ne.s32.totalorder %s38, %s39
    %p50 = scmp.eq.s32.totalorder %s16, 0
    %p51 = por %p49, %p50
    %p52 = scmp.ne.s32.totalorder %s38, %s39
    %p53 = scmp.eq.s32.totalorder %s17, 1
    %p54 = por %p52, %p53
    %p56 = scmp.ne.s32.totalorder %s39, %s55
    %p57 = scmp.eq.s32.totalorder %s17, 0
    %p58 = por %p56, %p57
    %s60 = sadd.s32 %s59, 1
    %p63 = scmp.eq.s32.totalorder %s11, 1
    %p64 = scmp.ne.s32.totalorder %s59, %s61
    %p65 = scmp.eq.s32.totalorder %s11, 0
    %p66 = por %p64, %p65
    %p67 = scmp.ne.s32.totalorder %s59, %s61
    %p68 = scmp.eq.s32.totalorder %s16, 1
    %p69 = por %p67, %p68
    %p70 = scmp.ne.s32.totalorder %s61, %s62
    %p71 = scmp.eq.s32.totalorder %s16, 0
    %p72 = por %p70, %p71
    %p73 = scmp.ne.s32.totalorder %s61, %s62
    %p74 = scmp.eq.s32.totalorder %s17, 1
    %p75 = por %p73, %p74
    %p77 = scmp.ne.s32.totalorder %s62, %s76
    %p78 = scmp.eq.s32.totalorder %s17, 0
    %p79 = por %p77, %p78
    %s81 = sadd.s32 %s80, 1
    %p84 = scmp.eq.s32.totalorder %s11, 1
    %p85 = scmp.ne.s32.totalorder %s80, %s82
    %p86 = scmp.eq.s32.totalorder %s11, 0
    %p87 = por %p85, %p86
    %p88 = scmp.ne.s32.totalorder %s80, %s82
    %p89 = scmp.eq.s32.totalorder %s16, 1
    %p90 = por %p88, %p89
    %p91 = scmp.ne.s32.totalorder %s82, %s83
    %p92 = scmp.eq.s32.totalorder %s16, 0
    %p93 = por %p91, %p92
    %p94 = scmp.ne.s32.totalorder %s82, %s83
    %p95 = scmp.eq.s32.totalorder %s17, 1
    %p96 = por %p94, %p95
    %p98 = scmp.ne.s32.totalorder %s83, %s97
    %p99 = scmp.eq.s32.totalorder %s17, 0
    %p100 = por %p98, %p99
    %s102 = sadd.s32 %s101, 1
    %p105 = scmp.eq.s32.totalorder %s11, 1
    %p106 = scmp.ne.s32.totalorder %s101, %s103
    %p107 = scmp.eq.s32.totalorder %s11, 0
    %p108 = por %p106, %p107
    %p109 = scmp.ne.s32.totalorder %s101, %s103
    %p110 = scmp.eq.s32.totalorder %s16, 1
    %p111 = por %p109, %p110
    %p112 = scmp.ne.s32.totalorder %s103, %s104
    %p113 = scmp.eq.s32.totalorder %s16, 0
    %p114 = por %p112, %p113
    %p115 = scmp.ne.s32.totalorder %s103, %s104
    %p116 = scmp.eq.s32.totalorder %s17, 1
    %p117 = por %p115, %p116
    %p119 = scmp.ne.s32.totalorder %s104, %s118
    %p120 = scmp.eq.s32.totalorder %s17, 0
    %p121 = por %p119, %p120
    %s123 = sadd.s32 %s122, 1
    %p126 = scmp.eq.s32.totalorder %s11, 1
    %p127 = scmp.ne.s32.totalorder %s122, %s124
    %p128 = scmp.eq.s32.totalorder %s11, 0
    %p129 = por %p127, %p128
    %p130 = scmp.ne.s32.totalorder %s122, %s124
    %p131 = scmp.eq.s32.totalorder %s16, 1
    %p132 = por %p130, %p131
    %p133 = scmp.ne.s32.totalorder %s124, %s125
    %p134 = scmp.eq.s32.totalorder %s16, 0
    %p135 = por %p133, %p134
    %p136 = scmp.ne.s32.totalorder %s124, %s125
    %p137 = scmp.eq.s32.totalorder %s17, 1
    %p138 = por %p136, %p137
    %p140 = scmp.ne.s32.totalorder %s125, %s139
    %p141 = scmp.eq.s32.totalorder %s17, 0
    %p142 = por %p140, %p141
    %s143 = ssub.s32 %s18, %s30
    %s144 = ssub.s32 %s19, %s26
    %s145 = sor.u32 %s143, %s144
    %p146 = scmp.eq.s32.totalorder %s145, 0
    %s148 = sadd.s32 %s147, 1
    %s149 = scalar_select %p146, %s147, %s148
    %p152 = pneg %p146
    %p153 = scmp.eq.s32.totalorder %s11, 1
    %p154 = por %p152, %p153
    %p155 = scmp.ne.s32.totalorder %s147, %s150
    %p156 = scmp.eq.s32.totalorder %s11, 0
    %p157 = por %p155, %p156
    %p158 = scmp.ne.s32.totalorder %s147, %s150
    %p159 = scmp.eq.s32.totalorder %s16, 1
    %p160 = por %p158, %p159
    %p161 = scmp.ne.s32.totalorder %s150, %s151
    %p162 = scmp.eq.s32.totalorder %s16, 0
    %p163 = por %p161, %p162
    %p164 = scmp.ne.s32.totalorder %s150, %s151
    %p165 = scmp.eq.s32.totalorder %s17, 1
    %p166 = por %p164, %p165
    %p168 = scmp.ne.s32.totalorder %s151, %s167
    %p169 = scmp.eq.s32.totalorder %s17, 0
    %p170 = por %p168, %p169
    %p171 = scmp.le.s32.totalorder 1, %s11
    %p172 = scmp.lt.s32.totalorder %s11, 3
    %p173 = pnand %p171, %p172
    %p174 = pneg %p173
    // Predicated region
    $region9: #{model_forward.1} parent=5 // pred_check
      _
    $region10: #{model_forward.1} parent=5 // pred_check_branch
      %176 = sbr.rel (%p173) target = $region12
    $region11: #{model_forward.1} parent=5 // pred_region
      %s177 = ssub.s32 %s11, 1
      // Predicated region
      $region13: #{model_forward.1} parent=11 // pred_check
        %p178 = pneg %p72
      $region14: #{model_forward.1} parent=11 // pred_check_branch
        %180 = sbr.rel (%p178) target = $region16
      $region15: #{model_forward.1} parent=11 // pred_region
        _
      $region16: #{model_forward.1} parent=11 // pred_fallthru
        _
      // Predicated region
      $region17: #{model_forward.1} parent=11 // pred_check
        %p181 = pneg %p93
      $region18: #{model_forward.1} parent=11 // pred_check_branch
        %183 = sbr.rel (%p181) target = $region20
      $region19: #{model_forward.1} parent=11 // pred_region
        _
      $region20: #{model_forward.1} parent=11 // pred_fallthru
        _
      // Predicated region
      $region21: #{model_forward.1} parent=11 // pred_check
        %p184 = pneg %p114
      $region22: #{model_forward.1} parent=11 // pred_check_branch
        %186 = sbr.rel (%p184) target = $region24
      $region23: #{model_forward.1} parent=11 // pred_region
        _
      $region24: #{model_forward.1} parent=11 // pred_fallthru
        _
      // Predicated region
      $region25: #{model_forward.1} parent=11 // pred_check
        %p187 = pneg %p135
      $region26: #{model_forward.1} parent=11 // pred_check_branch
        %189 = sbr.rel (%p187) target = $region28
      $region27: #{model_forward.1} parent=11 // pred_region
        _
      $region28: #{model_forward.1} parent=11 // pred_fallthru
        _
    $region12: #{model_forward.1} parent=5 // pred_fallthru
      _
    %p190 = scmp.lt.s32.totalorder %s11, 2
    // Predicated region
    $region29: #{model_forward.1} parent=5 // pred_check
      %p191 = pneg %p190
    $region30: #{model_forward.1} parent=5 // pred_check_branch
      %193 = sbr.rel (%p191) target = $region32
    $region31: #{model_forward.1} parent=5 // pred_region
      // Predicated region
      $region33: #{model_forward.1} parent=31 // pred_check
        %p194 = pneg %p45
      $region34: #{model_forward.1} parent=31 // pred_check_branch
        %196 = sbr.rel (%p194) target = $region36
      $region35: #{model_forward.1} parent=31 // pred_region
        %s197 = smul.u32 10, %s19
        %p198 = scmp.lt.s32.totalorder %s18, 1
        %s199 = scalar_select %p198, %s18, 1
        %p200 = scmp.lt.s32.totalorder %s197, 9
        %s201 = scalar_select %p200, %s197, 9
        %s202 = smul.addr %s199, 10
        %s203 = sadd.s32 %s201, %s202
        %s204 = smul.addr %s203, 4
        %s205 = scalar_lea.vmem %s0, %s204
        %s206 = smul.u32 10, %s19
      $region36: #{model_forward.1} parent=31 // pred_fallthru
        _
    $region32: #{model_forward.1} parent=5 // pred_fallthru
      _
    %p207 = scmp.le.s32.totalorder 1, %s11
    %p208 = scmp.lt.s32.totalorder %s11, 3
    %p209 = pnand %p207, %p208
    %p210 = pneg %p209
    // Predicated region
    $region37: #{model_forward.1} parent=5 // pred_check
      _
    $region38: #{model_forward.1} parent=5 // pred_check_branch
      %212 = sbr.rel (%p209) target = $region40
    $region39: #{model_forward.1} parent=5 // pred_region
      %s213 = ssub.s32 %s11, 1
      %s214 = smul.u32 10, %s21
      %p215 = scmp.lt.s32.totalorder %s20, 1
      %s216 = scalar_select %p215, %s20, 1
      %p217 = scmp.lt.s32.totalorder %s214, 9
      %s218 = scalar_select %p217, %s214, 9
      %s219 = smul.addr %s216, 10
      %s220 = sadd.s32 %s218, %s219
      %s221 = smul.addr %s220, 4
      %s222 = scalar_lea.vmem %s0, %s221
      %p223 = pneg %p51
      %p224 = pneg %p48
      %p225 = pneg %p72
      %p226 = pneg %p69
      %p227 = pneg %p93
      %p228 = pneg %p90
      %p229 = pneg %p114
      %p230 = pneg %p111
      %p231 = pneg %p135
      %p232 = pneg %p132
      %p233 = pneg %p163
      %p234 = pneg %p160
      %s235 = smul.u32 10, %s21
      %p236 = scmp.lt.s32.totalorder %s20, 1
      %s237 = scalar_select %p236, %s20, 1
      %p238 = scmp.lt.s32.totalorder %s235, 9
      %s239 = scalar_select %p238, %s235, 9
      %s240 = smul.addr %s237, 10
      %s241 = sadd.s32 %s239, %s240
      %s242 = smul.addr %s241, 8
      %s243 = scalar_lea.vmem %s5, %s242
      %s244 = smul.u32 10, %s21
      %p245 = scmp.lt.s32.totalorder %s20, 1
      %s246 = scalar_select %p245, %s20, 1
      %p247 = scmp.lt.s32.totalorder %s244, 9
      %s248 = scalar_select %p247, %s244, 9
      %s249 = smul.addr %s246, 10
      %s250 = sadd.s32 %s248, %s249
      %s251 = smul.addr %s250, 4
      %s252 = scalar_lea.vmem %s0, %s251
      %s253 = smul.u32 10, %s21
      %s254 = smul.u32 10, %s21
      %p255 = scmp.lt.s32.totalorder %s20, 1
      %s256 = scalar_select %p255, %s20, 1
      %p257 = scmp.lt.s32.totalorder %s254, 9
      %s258 = scalar_select %p257, %s254, 9
      %s259 = smul.addr %s256, 10
      %s260 = sadd.s32 %s258, %s259
      %s261 = smul.addr %s260, 8
      %s262 = scalar_lea.vmem %s5, %s261
      %s263 = smul.u32 10, %s21
      %v264 = vld [vmem:[%s252] sm:$0x77]
      %v265 = vld [vmem:[%s252 + $0x8] sm:$0x77]
      %v266 = vld [vmem:[%s252 + $0x10] sm:$0x77]
      %v267 = vld [vmem:[%s252 + $0x18] sm:$0x77]
      %v268 = vld [vmem:[%s252 + $0x20] sm:$0x77]
      %v269 = vld [vmem:[%s1] sm:$0xff]
      %v270 = vmul.f32 %v269, 6.0
      %v271 = vld [vmem:[%s3] sm:$0xff]
      %v272 = vmul.f32 %v271, 6.0
      %274 = vset.pattern.permute.xlu0 0
      %275 = vperm.xlu0 %274, %v272
      %v276 = vpop.permute.xlu0 %275
      %v283 = vcombine.high %v264, %v264
      %v284 = vcombine.high %v265, %v265
      %v285 = vcombine.high %v266, %v266
      %v286 = vcombine.high %v267, %v267
      %v287 = vcombine.high %v268, %v268
      %vm288 = vcmask 23552
      %v290 = vsel %vm288, %v270, 0
      %vm292 = vcmask 1042432
      %v293 = vsel %vm292, %v264, 0
      %v295 = vsel %vm292, %v283, 0
      %v297 = vsel %vm292, %v265, 0
      %v299 = vsel %vm292, %v284, 0
      %v301 = vsel %vm292, %v266, 0
      %v303 = vsel %vm292, %v285, 0
      %v305 = vsel %vm292, %v267, 0
      %v307 = vsel %vm292, %v286, 0
      %v309 = vsel %vm292, %v268, 0
      %v311 = vsel %vm292, %v287, 0
      %313 = vmatprep.subr.mxu0 %v295
      %314 = vmatpush1.msra.mxu0 %v293
      %315 = vmatprep.subr.mxu0 0.0
      %316 = vmatpush1.msra.mxu0 0.0
      %317 = vmatprep.subr.mxu0 0.0
      %318 = vmatpush1.msra.mxu0 0.0
      %319 = vmatprep.subr.mxu0 0.0
      %320 = vmatpush1.msra.mxu0 0.0
      %321 = vmatprep.subr.mxu0 0.0
      %322 = vmatpush1.msra.mxu0 0.0
      %323 = vmatprep.subr.mxu0 0.0
      %324 = vmatpush1.msra.mxu0 0.0
      %325 = vmatprep.subr.mxu0 0.0
      %326 = vmatpush1.msra.mxu0 0.0
      %327 = vmatprep.subr.mxu0 0.0
      %328 = vmatpush1.msra.mxu0 0.0
      %329 = vmatprep.subr.mxu0 0.0
      %330 = vmatpush1.msra.mxu0 0.0
      %331 = vmatprep.subr.mxu0 0.0
      %332 = vmatpush1.msra.mxu0 0.0
      %333 = vmatprep.subr.mxu0 0.0
      %334 = vmatpush1.msra.mxu0 0.0
      %335 = vmatprep.subr.mxu0 0.0
      %336 = vmatpush1.msra.mxu0 0.0
      %337 = vmatprep.subr.mxu0 0.0
      %338 = vmatpush1.msra.mxu0 0.0
      %339 = vmatprep.subr.mxu0 0.0
      %340 = vmatpush1.msra.mxu0 0.0
      %341 = vmatprep.subr.mxu0 0.0
      %342 = vmatpush1.msra.mxu0 0.0
      %343 = vmatprep.subr.mxu0 0.0
      %344 = vmatpush1.msra.mxu0 0.0
      %345 = vmatprep.subr.mxu0 0.0
      %346 = vmatpush1.msra.mxu0 0.0
      %347 = vmatprep.subr.mxu0 0.0
      %348 = vmatpush1.msra.mxu0 0.0
      %349 = vmatprep.subr.mxu0 0.0
      %350 = vmatpush1.msra.mxu0 0.0
      %351 = vmatprep.subr.mxu0 0.0
      %352 = vmatpush1.msra.mxu0 0.0
      %353 = vmatprep.subr.mxu0 0.0
      %354 = vmatpush1.msra.mxu0 0.0
      %355 = vmatprep.subr.mxu0 0.0
      %356 = vmatpush1.msra.mxu0 0.0
      %357 = vmatprep.subr.mxu0 0.0
      %358 = vmatpush1.msra.mxu0 0.0
      %359 = vmatprep.subr.mxu0 0.0
      %360 = vmatpush1.msra.mxu0 0.0
      %361 = vmatprep.subr.mxu0 0.0
      %362 = vmatpush1.msra.mxu0 0.0
      %363 = vmatprep.subr.mxu0 0.0
      %364 = vmatpush1.msra.mxu0 0.0
      %365 = vmatprep.subr.mxu0 0.0
      %366 = vmatpush1.msra.mxu0 0.0
      %367 = vmatprep.subr.mxu0 0.0
      %368 = vmatpush1.msra.mxu0 0.0
      %369 = vmatprep.subr.mxu0 0.0
      %370 = vmatpush1.msra.mxu0 0.0
      %371 = vmatprep.subr.mxu0 0.0
      %372 = vmatpush1.msra.mxu0 0.0
      %373 = vmatprep.subr.mxu0 0.0
      %374 = vmatpush1.msra.mxu0 0.0
      %375 = vmatprep.subr.mxu0 0.0
      %376 = vmatpush1.msra.mxu0 0.0
      %377 = vmatprep.mubr.f32.mxu0 0.0
      %378 = vmatmul.mubr.f32.gmra.mrb[0].mxu0 %v290
      %v379 = vpop.f32.mrb[0].mxu0
      %v380 = vadd.f32 %v276, %v379
      %v381 = vpop.f32.mrb[0].mxu0
      %v382 = vadd.f32 %v276, %v381
      %383 = vdwg.mxu0
      %384 = vmatprep.subr.mxu0 %v299
      %385 = vmatpush1.msra.mxu0 %v297
      %386 = vmatprep.subr.mxu0 0.0
      %387 = vmatpush1.msra.mxu0 0.0
      %388 = vmatprep.subr.mxu0 0.0
      %389 = vmatpush1.msra.mxu0 0.0
      %390 = vmatprep.subr.mxu0 0.0
      %391 = vmatpush1.msra.mxu0 0.0
      %392 = vmatprep.subr.mxu0 0.0
      %393 = vmatpush1.msra.mxu0 0.0
      %394 = vmatprep.subr.mxu0 0.0
      %395 = vmatpush1.msra.mxu0 0.0
      %396 = vmatprep.subr.mxu0 0.0
      %397 = vmatpush1.msra.mxu0 0.0
      %398 = vmatprep.subr.mxu0 0.0
      %399 = vmatpush1.msra.mxu0 0.0
      %400 = vmatprep.subr.mxu0 0.0
      %401 = vmatpush1.msra.mxu0 0.0
      %402 = vmatprep.subr.mxu0 0.0
      %403 = vmatpush1.msra.mxu0 0.0
      %404 = vmatprep.subr.mxu0 0.0
      %405 = vmatpush1.msra.mxu0 0.0
      %406 = vmatprep.subr.mxu0 0.0
      %407 = vmatpush1.msra.mxu0 0.0
      %408 = vmatprep.subr.mxu0 0.0
      %409 = vmatpush1.msra.mxu0 0.0
      %410 = vmatprep.subr.mxu0 0.0
      %411 = vmatpush1.msra.mxu0 0.0
      %412 = vmatprep.subr.mxu0 0.0
      %413 = vmatpush1.msra.mxu0 0.0
      %414 = vmatprep.subr.mxu0 0.0
      %415 = vmatpush1.msra.mxu0 0.0
      %416 = vmatprep.subr.mxu0 0.0
      %417 = vmatpush1.msra.mxu0 0.0
      %418 = vmatprep.subr.mxu0 0.0
      %419 = vmatpush1.msra.mxu0 0.0
      %420 = vmatprep.subr.mxu0 0.0
      %421 = vmatpush1.msra.mxu0 0.0
      %422 = vmatprep.subr.mxu0 0.0
      %423 = vmatpush1.msra.mxu0 0.0
      %424 = vmatprep.subr.mxu0 0.0
      %425 = vmatpush1.msra.mxu0 0.0
      %426 = vmatprep.subr.mxu0 0.0
      %427 = vmatpush1.msra.mxu0 0.0
      %428 = vmatprep.subr.mxu0 0.0
      %429 = vmatpush1.msra.mxu0 0.0
      %430 = vmatprep.subr.mxu0 0.0
      %431 = vmatpush1.msra.mxu0 0.0
      %432 = vmatprep.subr.mxu0 0.0
      %433 = vmatpush1.msra.mxu0 0.0
      %434 = vmatprep.subr.mxu0 0.0
      %435 = vmatpush1.msra.mxu0 0.0
      %436 = vmatprep.subr.mxu0 0.0
      %437 = vmatpush1.msra.mxu0 0.0
      %438 = vmatprep.subr.mxu0 0.0
      %439 = vmatpush1.msra.mxu0 0.0
      %440 = vmatprep.subr.mxu0 0.0
      %441 = vmatpush1.msra.mxu0 0.0
      %442 = vmatprep.subr.mxu0 0.0
      %443 = vmatpush1.msra.mxu0 0.0
      %444 = vmatprep.subr.mxu0 0.0
      %445 = vmatpush1.msra.mxu0 0.0
      %446 = vmatprep.subr.mxu0 0.0
      %447 = vmatpush1.msra.mxu0 0.0
      %448 = vmatprep.mubr.f32.mxu0 0.0
      %449 = vmatmul.mubr.f32.gmra.mrb[0].mxu0 %v290
      %v450 = vpop.f32.mrb[0].mxu0
      %v451 = vadd.f32 %v276, %v450
      %v452 = vpop.f32.mrb[0].mxu0
      %v453 = vadd.f32 %v276, %v452
      %454 = vdwg.mxu0
      %455 = vmatprep.subr.mxu0 %v303
      %456 = vmatpush1.msra.mxu0 %v301
      %457 = vmatprep.subr.mxu0 0.0
      %458 = vmatpush1.msra.mxu0 0.0
      %459 = vmatprep.subr.mxu0 0.0
      %460 = vmatpush1.msra.mxu0 0.0
      %461 = vmatprep.subr.mxu0 0.0
      %462 = vmatpush1.msra.mxu0 0.0
      %463 = vmatprep.subr.mxu0 0.0
      %464 = vmatpush1.msra.mxu0 0.0
      %465 = vmatprep.subr.mxu0 0.0
      %466 = vmatpush1.msra.mxu0 0.0
      %467 = vmatprep.subr.mxu0 0.0
      %468 = vmatpush1.msra.mxu0 0.0
      %469 = vmatprep.subr.mxu0 0.0
      %470 = vmatpush1.msra.mxu0 0.0
      %471 = vmatprep.subr.mxu0 0.0
      %472 = vmatpush1.msra.mxu0 0.0
      %473 = vmatprep.subr.mxu0 0.0
      %474 = vmatpush1.msra.mxu0 0.0
      %475 = vmatprep.subr.mxu0 0.0
      %476 = vmatpush1.msra.mxu0 0.0
      %477 = vmatprep.subr.mxu0 0.0
      %478 = vmatpush1.msra.mxu0 0.0
      %479 = vmatprep.subr.mxu0 0.0
      %480 = vmatpush1.msra.mxu0 0.0
      %481 = vmatprep.subr.mxu0 0.0
      %482 = vmatpush1.msra.mxu0 0.0
      %483 = vmatprep.subr.mxu0 0.0
      %484 = vmatpush1.msra.mxu0 0.0
      %485 = vmatprep.subr.mxu0 0.0
      %486 = vmatpush1.msra.mxu0 0.0
      %487 = vmatprep.subr.mxu0 0.0
      %488 = vmatpush1.msra.mxu0 0.0
      %489 = vmatprep.subr.mxu0 0.0
      %490 = vmatpush1.msra.mxu0 0.0
      %491 = vmatprep.subr.mxu0 0.0
      %492 = vmatpush1.msra.mxu0 0.0
      %493 = vmatprep.subr.mxu0 0.0
      %494 = vmatpush1.msra.mxu0 0.0
      %495 = vmatprep.subr.mxu0 0.0
      %496 = vmatpush1.msra.mxu0 0.0
      %497 = vmatprep.subr.mxu0 0.0
      %498 = vmatpush1.msra.mxu0 0.0
      %499 = vmatprep.subr.mxu0 0.0
      %500 = vmatpush1.msra.mxu0 0.0
      %501 = vmatprep.subr.mxu0 0.0
      %502 = vmatpush1.msra.mxu0 0.0
      %503 = vmatprep.subr.mxu0 0.0
      %504 = vmatpush1.msra.mxu0 0.0
      %505 = vmatprep.subr.mxu0 0.0
      %506 = vmatpush1.msra.mxu0 0.0
      %507 = vmatprep.subr.mxu0 0.0
      %508 = vmatpush1.msra.mxu0 0.0
      %509 = vmatprep.subr.mxu0 0.0
      %510 = vmatpush1.msra.mxu0 0.0
      %511 = vmatprep.subr.mxu0 0.0
      %512 = vmatpush1.msra.mxu0 0.0
      %513 = vmatprep.subr.mxu0 0.0
      %514 = vmatpush1.msra.mxu0 0.0
      %515 = vmatprep.subr.mxu0 0.0
      %516 = vmatpush1.msra.mxu0 0.0
      %517 = vmatprep.subr.mxu0 0.0
      %518 = vmatpush1.msra.mxu0 0.0
      %519 = vmatprep.mubr.f32.mxu0 0.0
      %520 = vmatmul.mubr.f32.gmra.mrb[0].mxu0 %v290
      %v521 = vpop.f32.mrb[0].mxu0
      %v522 = vadd.f32 %v276, %v521
      %v523 = vpop.f32.mrb[0].mxu0
      %v524 = vadd.f32 %v276, %v523
      %525 = vdwg.mxu0
      %526 = vmatprep.subr.mxu0 %v307
      %527 = vmatpush1.msra.mxu0 %v305
      %528 = vmatprep.subr.mxu0 0.0
      %529 = vmatpush1.msra.mxu0 0.0
      %530 = vmatprep.subr.mxu0 0.0
      %531 = vmatpush1.msra.mxu0 0.0
      %532 = vmatprep.subr.mxu0 0.0
      %533 = vmatpush1.msra.mxu0 0.0
      %534 = vmatprep.subr.mxu0 0.0
      %535 = vmatpush1.msra.mxu0 0.0
      %536 = vmatprep.subr.mxu0 0.0
      %537 = vmatpush1.msra.mxu0 0.0
      %538 = vmatprep.subr.mxu0 0.0
      %539 = vmatpush1.msra.mxu0 0.0
      %540 = vmatprep.subr.mxu0 0.0
      %541 = vmatpush1.msra.mxu0 0.0
      %542 = vmatprep.subr.mxu0 0.0
      %543 = vmatpush1.msra.mxu0 0.0
      %544 = vmatprep.subr.mxu0 0.0
      %545 = vmatpush1.msra.mxu0 0.0
      %546 = vmatprep.subr.mxu0 0.0
      %547 = vmatpush1.msra.mxu0 0.0
      %548 = vmatprep.subr.mxu0 0.0
      %549 = vmatpush1.msra.mxu0 0.0
      %550 = vmatprep.subr.mxu0 0.0
      %551 = vmatpush1.msra.mxu0 0.0
      %552 = vmatprep.subr.mxu0 0.0
      %553 = vmatpush1.msra.mxu0 0.0
      %554 = vmatprep.subr.mxu0 0.0
      %555 = vmatpush1.msra.mxu0 0.0
      %556 = vmatprep.subr.mxu0 0.0
      %557 = vmatpush1.msra.mxu0 0.0
      %558 = vmatprep.subr.mxu0 0.0
      %559 = vmatpush1.msra.mxu0 0.0
      %560 = vmatprep.subr.mxu0 0.0
      %561 = vmatpush1.msra.mxu0 0.0
      %562 = vmatprep.subr.mxu0 0.0
      %563 = vmatpush1.msra.mxu0 0.0
      %564 = vmatprep.subr.mxu0 0.0
      %565 = vmatpush1.msra.mxu0 0.0
      %566 = vmatprep.subr.mxu0 0.0
      %567 = vmatpush1.msra.mxu0 0.0
      %568 = vmatprep.subr.mxu0 0.0
      %569 = vmatpush1.msra.mxu0 0.0
      %570 = vmatprep.subr.mxu0 0.0
      %571 = vmatpush1.msra.mxu0 0.0
      %572 = vmatprep.subr.mxu0 0.0
      %573 = vmatpush1.msra.mxu0 0.0
      %574 = vmatprep.subr.mxu0 0.0
      %575 = vmatpush1.msra.mxu0 0.0
      %576 = vmatprep.subr.mxu0 0.0
      %577 = vmatpush1.msra.mxu0 0.0
      %578 = vmatprep.subr.mxu0 0.0
      %579 = vmatpush1.msra.mxu0 0.0
      %580 = vmatprep.subr.mxu0 0.0
      %581 = vmatpush1.msra.mxu0 0.0
      %582 = vmatprep.subr.mxu0 0.0
      %583 = vmatpush1.msra.mxu0 0.0
      %584 = vmatprep.subr.mxu0 0.0
      %585 = vmatpush1.msra.mxu0 0.0
      %586 = vmatprep.subr.mxu0 0.0
      %587 = vmatpush1.msra.mxu0 0.0
      %588 = vmatprep.subr.mxu0 0.0
      %589 = vmatpush1.msra.mxu0 0.0
      %590 = vmatprep.mubr.f32.mxu0 0.0
      %591 = vmatmul.mubr.f32.gmra.mrb[0].mxu0 %v290
      %v592 = vpop.f32.mrb[0].mxu0
      %v593 = vadd.f32 %v276, %v592
      %v594 = vpop.f32.mrb[0].mxu0
      %v595 = vadd.f32 %v276, %v594
      %596 = vdwg.mxu0
      %597 = vmatprep.subr.mxu0 %v311
      %598 = vmatpush1.msra.mxu0 %v309
      %599 = vmatprep.subr.mxu0 0.0
      %600 = vmatpush1.msra.mxu0 0.0
      %601 = vmatprep.subr.mxu0 0.0
      %602 = vmatpush1.msra.mxu0 0.0
      %603 = vmatprep.subr.mxu0 0.0
      %604 = vmatpush1.msra.mxu0 0.0
      %605 = vmatprep.subr.mxu0 0.0
      %606 = vmatpush1.msra.mxu0 0.0
      %607 = vmatprep.subr.mxu0 0.0
      %608 = vmatpush1.msra.mxu0 0.0
      %609 = vmatprep.subr.mxu0 0.0
      %610 = vmatpush1.msra.mxu0 0.0
      %611 = vmatprep.subr.mxu0 0.0
      %612 = vmatpush1.msra.mxu0 0.0
      %613 = vmatprep.subr.mxu0 0.0
      %614 = vmatpush1.msra.mxu0 0.0
      %615 = vmatprep.subr.mxu0 0.0
      %616 = vmatpush1.msra.mxu0 0.0
      %617 = vmatprep.subr.mxu0 0.0
      %618 = vmatpush1.msra.mxu0 0.0
      %619 = vmatprep.subr.mxu0 0.0
      %620 = vmatpush1.msra.mxu0 0.0
      %621 = vmatprep.subr.mxu0 0.0
      %622 = vmatpush1.msra.mxu0 0.0
      %623 = vmatprep.subr.mxu0 0.0
      %624 = vmatpush1.msra.mxu0 0.0
      %625 = vmatprep.subr.mxu0 0.0
      %626 = vmatpush1.msra.mxu0 0.0
      %627 = vmatprep.subr.mxu0 0.0
      %628 = vmatpush1.msra.mxu0 0.0
      %629 = vmatprep.subr.mxu0 0.0
      %630 = vmatpush1.msra.mxu0 0.0
      %631 = vmatprep.subr.mxu0 0.0
      %632 = vmatpush1.msra.mxu0 0.0
      %633 = vmatprep.subr.mxu0 0.0
      %634 = vmatpush1.msra.mxu0 0.0
      %635 = vmatprep.subr.mxu0 0.0
      %636 = vmatpush1.msra.mxu0 0.0
      %637 = vmatprep.subr.mxu0 0.0
      %638 = vmatpush1.msra.mxu0 0.0
      %639 = vmatprep.subr.mxu0 0.0
      %640 = vmatpush1.msra.mxu0 0.0
      %641 = vmatprep.subr.mxu0 0.0
      %642 = vmatpush1.msra.mxu0 0.0
      %643 = vmatprep.subr.mxu0 0.0
      %644 = vmatpush1.msra.mxu0 0.0
      %645 = vmatprep.subr.mxu0 0.0
      %646 = vmatpush1.msra.mxu0 0.0
      %647 = vmatprep.subr.mxu0 0.0
      %648 = vmatpush1.msra.mxu0 0.0
      %649 = vmatprep.subr.mxu0 0.0
      %650 = vmatpush1.msra.mxu0 0.0
      %651 = vmatprep.subr.mxu0 0.0
      %652 = vmatpush1.msra.mxu0 0.0
      %653 = vmatprep.subr.mxu0 0.0
      %654 = vmatpush1.msra.mxu0 0.0
      %655 = vmatprep.subr.mxu0 0.0
      %656 = vmatpush1.msra.mxu0 0.0
      %657 = vmatprep.subr.mxu0 0.0
      %658 = vmatpush1.msra.mxu0 0.0
      %659 = vmatprep.subr.mxu0 0.0
      %660 = vmatpush1.msra.mxu0 0.0
      %661 = vmatprep.mubr.f32.mxu0 0.0
      %662 = vmatmul.mubr.f32.gmra.mrb[0].mxu0 %v290
      %v663 = vpop.f32.mrb[0].mxu0
      %v664 = vadd.f32 %v276, %v663
      %v665 = vpop.f32.mrb[0].mxu0
      %v666 = vadd.f32 %v276, %v665
      %667 = vdwg.mxu0
      %v668 = vld [vmem:[%s2] sm:$0xff]
      %v669 = vmul.f32 %v668, 4.0
      %v670 = vld [vmem:[%s4] sm:$0xff]
      %v671 = vmul.f32 %v670, 4.0
      %673 = vset.pattern.permute.xlu0 0
      %674 = vperm.xlu0 %673, %v671
      %v675 = vpop.permute.xlu0 %674
      %v678 = vsel %vm288, %v669, 0
      %680 = vmatprep.subr.mxu0 %v295
      %681 = vmatpush1.msra.mxu0 %v293
      %682 = vmatprep.subr.mxu0 0.0
      %683 = vmatpush1.msra.mxu0 0.0
      %684 = vmatprep.subr.mxu0 0.0
      %685 = vmatpush1.msra.mxu0 0.0
      %686 = vmatprep.subr.mxu0 0.0
      %687 = vmatpush1.msra.mxu0 0.0
      %688 = vmatprep.subr.mxu0 0.0
      %689 = vmatpush1.msra.mxu0 0.0
      %690 = vmatprep.subr.mxu0 0.0
      %691 = vmatpush1.msra.mxu0 0.0
      %692 = vmatprep.subr.mxu0 0.0
      %693 = vmatpush1.msra.mxu0 0.0
      %694 = vmatprep.subr.mxu0 0.0
      %695 = vmatpush1.msra.mxu0 0.0
      %696 = vmatprep.subr.mxu0 0.0
      %697 = vmatpush1.msra.mxu0 0.0
      %698 = vmatprep.subr.mxu0 0.0
      %699 = vmatpush1.msra.mxu0 0.0
      %700 = vmatprep.subr.mxu0 0.0
      %701 = vmatpush1.msra.mxu0 0.0
      %702 = vmatprep.subr.mxu0 0.0
      %703 = vmatpush1.msra.mxu0 0.0
      %704 = vmatprep.subr.mxu0 0.0
      %705 = vmatpush1.msra.mxu0 0.0
      %706 = vmatprep.subr.mxu0 0.0
      %707 = vmatpush1.msra.mxu0 0.0
      %708 = vmatprep.subr.mxu0 0.0
      %709 = vmatpush1.msra.mxu0 0.0
      %710 = vmatprep.subr.mxu0 0.0
      %711 = vmatpush1.msra.mxu0 0.0
      %712 = vmatprep.subr.mxu0 0.0
      %713 = vmatpush1.msra.mxu0 0.0
      %714 = vmatprep.subr.mxu0 0.0
      %715 = vmatpush1.msra.mxu0 0.0
      %716 = vmatprep.subr.mxu0 0.0
      %717 = vmatpush1.msra.mxu0 0.0
      %718 = vmatprep.subr.mxu0 0.0
      %719 = vmatpush1.msra.mxu0 0.0
      %720 = vmatprep.subr.mxu0 0.0
      %721 = vmatpush1.msra.mxu0 0.0
      %722 = vmatprep.subr.mxu0 0.0
      %723 = vmatpush1.msra.mxu0 0.0
      %724 = vmatprep.subr.mxu0 0.0
      %725 = vmatpush1.msra.mxu0 0.0
      %726 = vmatprep.subr.mxu0 0.0
      %727 = vmatpush1.msra.mxu0 0.0
      %728 = vmatprep.subr.mxu0 0.0
      %729 = vmatpush1.msra.mxu0 0.0
      %730 = vmatprep.subr.mxu0 0.0
      %731 = vmatpush1.msra.mxu0 0.0
      %732 = vmatprep.subr.mxu0 0.0
      %733 = vmatpush1.msra.mxu0 0.0
      %734 = vmatprep.subr.mxu0 0.0
      %735 = vmatpush1.msra.mxu0 0.0
      %736 = vmatprep.subr.mxu0 0.0
      %737 = vmatpush1.msra.mxu0 0.0
      %738 = vmatprep.subr.mxu0 0.0
      %739 = vmatpush1.msra.mxu0 0.0
      %740 = vmatprep.subr.mxu0 0.0
      %741 = vmatpush1.msra.mxu0 0.0
      %742 = vmatprep.subr.mxu0 0.0
      %743 = vmatpush1.msra.mxu0 0.0
      %744 = vmatprep.mubr.f32.mxu0 0.0
      %745 = vmatmul.mubr.f32.gmra.mrb[0].mxu0 %v678
      %v746 = vpop.f32.mrb[0].mxu0
      %v747 = vadd.f32 %v675, %v746
      %v748 = vpop.f32.mrb[0].mxu0
      %v749 = vadd.f32 %v675, %v748
      %750 = vdwg.mxu0
      %751 = vmatprep.subr.mxu0 %v299
      %752 = vmatpush1.msra.mxu0 %v297
      %753 = vmatprep.subr.mxu0 0.0
      %754 = vmatpush1.msra.mxu0 0.0
      %755 = vmatprep.subr.mxu0 0.0
      %756 = vmatpush1.msra.mxu0 0.0
      %757 = vmatprep.subr.mxu0 0.0
      %758 = vmatpush1.msra.mxu0 0.0
      %759 = vmatprep.subr.mxu0 0.0
      %760 = vmatpush1.msra.mxu0 0.0
      %761 = vmatprep.subr.mxu0 0.0
      %762 = vmatpush1.msra.mxu0 0.0
      %763 = vmatprep.subr.mxu0 0.0
      %764 = vmatpush1.msra.mxu0 0.0
      %765 = vmatprep.subr.mxu0 0.0
      %766 = vmatpush1.msra.mxu0 0.0
      %767 = vmatprep.subr.mxu0 0.0
      %768 = vmatpush1.msra.mxu0 0.0
      %769 = vmatprep.subr.mxu0 0.0
      %770 = vmatpush1.msra.mxu0 0.0
      %771 = vmatprep.subr.mxu0 0.0
      %772 = vmatpush1.msra.mxu0 0.0
      %773 = vmatprep.subr.mxu0 0.0
      %774 = vmatpush1.msra.mxu0 0.0
      %775 = vmatprep.subr.mxu0 0.0
      %776 = vmatpush1.msra.mxu0 0.0
      %777 = vmatprep.subr.mxu0 0.0
      %778 = vmatpush1.msra.mxu0 0.0
      %779 = vmatprep.subr.mxu0 0.0
      %780 = vmatpush1.msra.mxu0 0.0
      %781 = vmatprep.subr.mxu0 0.0
      %782 = vmatpush1.msra.mxu0 0.0
      %783 = vmatprep.subr.mxu0 0.0
      %784 = vmatpush1.msra.mxu0 0.0
      %785 = vmatprep.subr.mxu0 0.0
      %786 = vmatpush1.msra.mxu0 0.0
      %787 = vmatprep.subr.mxu0 0.0
      %788 = vmatpush1.msra.mxu0 0.0
      %789 = vmatprep.subr.mxu0 0.0
      %790 = vmatpush1.msra.mxu0 0.0
      %791 = vmatprep.subr.mxu0 0.0
      %792 = vmatpush1.msra.mxu0 0.0
      %793 = vmatprep.subr.mxu0 0.0
      %794 = vmatpush1.msra.mxu0 0.0
      %795 = vmatprep.subr.mxu0 0.0
      %796 = vmatpush1.msra.mxu0 0.0
      %797 = vmatprep.subr.mxu0 0.0
      %798 = vmatpush1.msra.mxu0 0.0
      %799 = vmatprep.subr.mxu0 0.0
      %800 = vmatpush1.msra.mxu0 0.0
      %801 = vmatprep.subr.mxu0 0.0
      %802 = vmatpush1.msra.mxu0 0.0
      %803 = vmatprep.subr.mxu0 0.0
      %804 = vmatpush1.msra.mxu0 0.0
      %805 = vmatprep.subr.mxu0 0.0
      %806 = vmatpush1.msra.mxu0 0.0
      %807 = vmatprep.subr.mxu0 0.0
      %808 = vmatpush1.msra.mxu0 0.0
      %809 = vmatprep.subr.mxu0 0.0
      %810 = vmatpush1.msra.mxu0 0.0
      %811 = vmatprep.subr.mxu0 0.0
      %812 = vmatpush1.msra.mxu0 0.0
      %813 = vmatprep.subr.mxu0 0.0
      %814 = vmatpush1.msra.mxu0 0.0
      %815 = vmatprep.mubr.f32.mxu0 0.0
      %816 = vmatmul.mubr.f32.gmra.mrb[0].mxu0 %v678
      %v817 = vpop.f32.mrb[0].mxu0
      %v818 = vadd.f32 %v675, %v817
      %v819 = vpop.f32.mrb[0].mxu0
      %v820 = vadd.f32 %v675, %v819
      %821 = vdwg.mxu0
      %822 = vmatprep.subr.mxu0 %v303
      %823 = vmatpush1.msra.mxu0 %v301
      %824 = vmatprep.subr.mxu0 0.0
      %825 = vmatpush1.msra.mxu0 0.0
      %826 = vmatprep.subr.mxu0 0.0
      %827 = vmatpush1.msra.mxu0 0.0
      %828 = vmatprep.subr.mxu0 0.0
      %829 = vmatpush1.msra.mxu0 0.0
      %830 = vmatprep.subr.mxu0 0.0
      %831 = vmatpush1.msra.mxu0 0.0
      %832 = vmatprep.subr.mxu0 0.0
      %833 = vmatpush1.msra.mxu0 0.0
      %834 = vmatprep.subr.mxu0 0.0
      %835 = vmatpush1.msra.mxu0 0.0
      %836 = vmatprep.subr.mxu0 0.0
      %837 = vmatpush1.msra.mxu0 0.0
      %838 = vmatprep.subr.mxu0 0.0
      %839 = vmatpush1.msra.mxu0 0.0
      %840 = vmatprep.subr.mxu0 0.0
      %841 = vmatpush1.msra.mxu0 0.0
      %842 = vmatprep.subr.mxu0 0.0
      %843 = vmatpush1.msra.mxu0 0.0
      %844 = vmatprep.subr.mxu0 0.0
      %845 = vmatpush1.msra.mxu0 0.0
      %846 = vmatprep.subr.mxu0 0.0
      %847 = vmatpush1.msra.mxu0 0.0
      %848 = vmatprep.subr.mxu0 0.0
      %849 = vmatpush1.msra.mxu0 0.0
      %850 = vmatprep.subr.mxu0 0.0
      %851 = vmatpush1.msra.mxu0 0.0
      %852 = vmatprep.subr.mxu0 0.0
      %853 = vmatpush1.msra.mxu0 0.0
      %854 = vmatprep.subr.mxu0 0.0
      %855 = vmatpush1.msra.mxu0 0.0
      %856 = vmatprep.subr.mxu0 0.0
      %857 = vmatpush1.msra.mxu0 0.0
      %858 = vmatprep.subr.mxu0 0.0
      %859 = vmatpush1.msra.mxu0 0.0
      %860 = vmatprep.subr.mxu0 0.0
      %861 = vmatpush1.msra.mxu0 0.0
      %862 = vmatprep.subr.mxu0 0.0
      %863 = vmatpush1.msra.mxu0 0.0
      %864 = vmatprep.subr.mxu0 0.0
      %865 = vmatpush1.msra.mxu0 0.0
      %866 = vmatprep.subr.mxu0 0.0
      %867 = vmatpush1.msra.mxu0 0.0
      %868 = vmatprep.subr.mxu0 0.0
      %869 = vmatpush1.msra.mxu0 0.0
      %870 = vmatprep.subr.mxu0 0.0
      %871 = vmatpush1.msra.mxu0 0.0
      %872 = vmatprep.subr.mxu0 0.0
      %873 = vmatpush1.msra.mxu0 0.0
      %874 = vmatprep.subr.mxu0 0.0
      %875 = vmatpush1.msra.mxu0 0.0
      %876 = vmatprep.subr.mxu0 0.0
      %877 = vmatpush1.msra.mxu0 0.0
      %878 = vmatprep.subr.mxu0 0.0
      %879 = vmatpush1.msra.mxu0 0.0
      %880 = vmatprep.subr.mxu0 0.0
      %881 = vmatpush1.msra.mxu0 0.0
      %882 = vmatprep.subr.mxu0 0.0
      %883 = vmatpush1.msra.mxu0 0.0
      %884 = vmatprep.subr.mxu0 0.0
      %885 = vmatpush1.msra.mxu0 0.0
      %886 = vmatprep.mubr.f32.mxu0 0.0
      %887 = vmatmul.mubr.f32.gmra.mrb[0].mxu0 %v678
      %v888 = vpop.f32.mrb[0].mxu0
      %v889 = vadd.f32 %v675, %v888
      %v890 = vpop.f32.mrb[0].mxu0
      %v891 = vadd.f32 %v675, %v890
      %892 = vdwg.mxu0
      %893 = vmatprep.subr.mxu0 %v307
      %894 = vmatpush1.msra.mxu0 %v305
      %895 = vmatprep.subr.mxu0 0.0
      %896 = vmatpush1.msra.mxu0 0.0
      %897 = vmatprep.subr.mxu0 0.0
      %898 = vmatpush1.msra.mxu0 0.0
      %899 = vmatprep.subr.mxu0 0.0
      %900 = vmatpush1.msra.mxu0 0.0
      %901 = vmatprep.subr.mxu0 0.0
      %902 = vmatpush1.msra.mxu0 0.0
      %903 = vmatprep.subr.mxu0 0.0
      %904 = vmatpush1.msra.mxu0 0.0
      %905 = vmatprep.subr.mxu0 0.0
      %906 = vmatpush1.msra.mxu0 0.0
      %907 = vmatprep.subr.mxu0 0.0
      %908 = vmatpush1.msra.mxu0 0.0
      %909 = vmatprep.subr.mxu0 0.0
      %910 = vmatpush1.msra.mxu0 0.0
      %911 = vmatprep.subr.mxu0 0.0
      %912 = vmatpush1.msra.mxu0 0.0
      %913 = vmatprep.subr.mxu0 0.0
      %914 = vmatpush1.msra.mxu0 0.0
      %915 = vmatprep.subr.mxu0 0.0
      %916 = vmatpush1.msra.mxu0 0.0
      %917 = vmatprep.subr.mxu0 0.0
      %918 = vmatpush1.msra.mxu0 0.0
      %919 = vmatprep.subr.mxu0 0.0
      %920 = vmatpush1.msra.mxu0 0.0
      %921 = vmatprep.subr.mxu0 0.0
      %922 = vmatpush1.msra.mxu0 0.0
      %923 = vmatprep.subr.mxu0 0.0
      %924 = vmatpush1.msra.mxu0 0.0
      %925 = vmatprep.subr.mxu0 0.0
      %926 = vmatpush1.msra.mxu0 0.0
      %927 = vmatprep.subr.mxu0 0.0
      %928 = vmatpush1.msra.mxu0 0.0
      %929 = vmatprep.subr.mxu0 0.0
      %930 = vmatpush1.msra.mxu0 0.0
      %931 = vmatprep.subr.mxu0 0.0
      %932 = vmatpush1.msra.mxu0 0.0
      %933 = vmatprep.subr.mxu0 0.0
      %934 = vmatpush1.msra.mxu0 0.0
      %935 = vmatprep.subr.mxu0 0.0
      %936 = vmatpush1.msra.mxu0 0.0
      %937 = vmatprep.subr.mxu0 0.0
      %938 = vmatpush1.msra.mxu0 0.0
      %939 = vmatprep.subr.mxu0 0.0
      %940 = vmatpush1.msra.mxu0 0.0
      %941 = vmatprep.subr.mxu0 0.0
      %942 = vmatpush1.msra.mxu0 0.0
      %943 = vmatprep.subr.mxu0 0.0
      %944 = vmatpush1.msra.mxu0 0.0
      %945 = vmatprep.subr.mxu0 0.0
      %946 = vmatpush1.msra.mxu0 0.0
      %947 = vmatprep.subr.mxu0 0.0
      %948 = vmatpush1.msra.mxu0 0.0
      %949 = vmatprep.subr.mxu0 0.0
      %950 = vmatpush1.msra.mxu0 0.0
      %951 = vmatprep.subr.mxu0 0.0
      %952 = vmatpush1.msra.mxu0 0.0
      %953 = vmatprep.subr.mxu0 0.0
      %954 = vmatpush1.msra.mxu0 0.0
      %955 = vmatprep.subr.mxu0 0.0
      %956 = vmatpush1.msra.mxu0 0.0
      %957 = vmatprep.mubr.f32.mxu0 0.0
      %958 = vmatmul.mubr.f32.gmra.mrb[0].mxu0 %v678
      %v959 = vpop.f32.mrb[0].mxu0
      %v960 = vadd.f32 %v675, %v959
      %v961 = vpop.f32.mrb[0].mxu0
      %v962 = vadd.f32 %v675, %v961
      %963 = vdwg.mxu0
      %964 = vmatprep.subr.mxu0 %v311
      %965 = vmatpush1.msra.mxu0 %v309
      %966 = vmatprep.subr.mxu0 0.0
      %967 = vmatpush1.msra.mxu0 0.0
      %968 = vmatprep.subr.mxu0 0.0
      %969 = vmatpush1.msra.mxu0 0.0
      %970 = vmatprep.subr.mxu0 0.0
      %971 = vmatpush1.msra.mxu0 0.0
      %972 = vmatprep.subr.mxu0 0.0
      %973 = vmatpush1.msra.mxu0 0.0
      %974 = vmatprep.subr.mxu0 0.0
      %975 = vmatpush1.msra.mxu0 0.0
      %976 = vmatprep.subr.mxu0 0.0
      %977 = vmatpush1.msra.mxu0 0.0
      %978 = vmatprep.subr.mxu0 0.0
      %979 = vmatpush1.msra.mxu0 0.0
      %980 = vmatprep.subr.mxu0 0.0
      %981 = vmatpush1.msra.mxu0 0.0
      %982 = vmatprep.subr.mxu0 0.0
      %983 = vmatpush1.msra.mxu0 0.0
      %984 = vmatprep.subr.mxu0 0.0
      %985 = vmatpush1.msra.mxu0 0.0
      %986 = vmatprep.subr.mxu0 0.0
      %987 = vmatpush1.msra.mxu0 0.0
      %988 = vmatprep.subr.mxu0 0.0
      %989 = vmatpush1.msra.mxu0 0.0
      %990 = vmatprep.subr.mxu0 0.0
      %991 = vmatpush1.msra.mxu0 0.0
      %992 = vmatprep.subr.mxu0 0.0
      %993 = vmatpush1.msra.mxu0 0.0
      %994 = vmatprep.subr.mxu0 0.0
      %995 = vmatpush1.msra.mxu0 0.0
      %996 = vmatprep.subr.mxu0 0.0
      %997 = vmatpush1.msra.mxu0 0.0
      %998 = vmatprep.subr.mxu0 0.0
      %999 = vmatpush1.msra.mxu0 0.0
      %1000 = vmatprep.subr.mxu0 0.0
      %1001 = vmatpush1.msra.mxu0 0.0
      %1002 = vmatprep.subr.mxu0 0.0
      %1003 = vmatpush1.msra.mxu0 0.0
      %1004 = vmatprep.subr.mxu0 0.0
      %1005 = vmatpush1.msra.mxu0 0.0
      %1006 = vmatprep.subr.mxu0 0.0
      %1007 = vmatpush1.msra.mxu0 0.0
      %1008 = vmatprep.subr.mxu0 0.0
      %1009 = vmatpush1.msra.mxu0 0.0
      %1010 = vmatprep.subr.mxu0 0.0
      %1011 = vmatpush1.msra.mxu0 0.0
      %1012 = vmatprep.subr.mxu0 0.0
      %1013 = vmatpush1.msra.mxu0 0.0
      %1014 = vmatprep.subr.mxu0 0.0
      %1015 = vmatpush1.msra.mxu0 0.0
      %1016 = vmatprep.subr.mxu0 0.0
      %1017 = vmatpush1.msra.mxu0 0.0
      %1018 = vmatprep.subr.mxu0 0.0
      %1019 = vmatpush1.msra.mxu0 0.0
      %1020 = vmatprep.subr.mxu0 0.0
      %1021 = vmatpush1.msra.mxu0 0.0
      %1022 = vmatprep.subr.mxu0 0.0
      %1023 = vmatpush1.msra.mxu0 0.0
      %1024 = vmatprep.subr.mxu0 0.0
      %1025 = vmatpush1.msra.mxu0 0.0
      %1026 = vmatprep.subr.mxu0 0.0
      %1027 = vmatpush1.msra.mxu0 0.0
      %1028 = vmatprep.mubr.f32.mxu0 0.0
      %1029 = vmatmul.mubr.f32.gmra.mrb[0].mxu0 %v678
      %v1030 = vpop.f32.mrb[0].mxu0
      %v1031 = vadd.f32 %v675, %v1030
      %v1032 = vpop.f32.mrb[0].mxu0
      %v1033 = vadd.f32 %v675, %v1032
      %1034 = vdwg.mxu0
      %v1035 = vmax.f32 %v380, 0.0
      %v1036 = vmax.f32 %v382, 0.0
      %v1037 = vmax.f32 %v451, 0.0
      %v1038 = vmax.f32 %v453, 0.0
      %v1039 = vmax.f32 %v522, 0.0
      %v1040 = vmax.f32 %v524, 0.0
      %v1041 = vmax.f32 %v593, 0.0
      %v1042 = vmax.f32 %v595, 0.0
      %v1043 = vmax.f32 %v664, 0.0
      %v1044 = vmax.f32 %v666, 0.0
      %v1045 = vmax.f32 %v747, 0.0
      %v1046 = vmax.f32 %v749, 0.0
      %v1047 = vmax.f32 %v818, 0.0
      %v1048 = vmax.f32 %v820, 0.0
      %v1049 = vmax.f32 %v889, 0.0
      %v1050 = vmax.f32 %v891, 0.0
      %v1051 = vmax.f32 %v960, 0.0
      %v1052 = vmax.f32 %v962, 0.0
      %v1053 = vmax.f32 %v1031, 0.0
      %v1054 = vmax.f32 %v1033, 0.0
      %v1055 = vadd.f32 %v1035, %v1045
      %v1056 = vadd.f32 %v1036, %v1046
      %v1057 = vadd.f32 %v1037, %v1047
      %v1058 = vadd.f32 %v1038, %v1048
      %v1059 = vadd.f32 %v1039, %v1049
      %v1060 = vadd.f32 %v1040, %v1050
      %v1061 = vadd.f32 %v1041, %v1051
      %v1062 = vadd.f32 %v1042, %v1052
      %v1063 = vadd.f32 %v1043, %v1053
      %v1064 = vadd.f32 %v1044, %v1054
      %1065 = vst [vmem:[%s262] sm:$0xff] %v1055
      %1066 = vst [vmem:[%s262 + $0x8] sm:$0xff] %v1056
      %1067 = vst [vmem:[%s262 + $0x10] sm:$0xff] %v1057
      %1068 = vst [vmem:[%s262 + $0x18] sm:$0xff] %v1058
      %1069 = vst [vmem:[%s262 + $0x20] sm:$0xff] %v1059
      %1070 = vst [vmem:[%s262 + $0x28] sm:$0xff] %v1060
      %1071 = vst [vmem:[%s262 + $0x30] sm:$0xff] %v1061
      %1072 = vst [vmem:[%s262 + $0x38] sm:$0xff] %v1062
      %1073 = vst [vmem:[%s262 + $0x40] sm:$0xff] %v1063
      %vm1074 = vcmask 31744
      %1075 = vst.msk [vmem:[%s262 + $0x48] sm:$0xff] %vm1074, %v1064
      %s1076 = smul.u32 10, %s21
      %p1077 = scmp.lt.s32.totalorder %s20, 1
      %s1078 = scalar_select %p1077, %s20, 1
      %p1079 = scmp.lt.s32.totalorder %s1076, 9
      %s1080 = scalar_select %p1079, %s1076, 9
      %s1081 = smul.addr %s1078, 10
      %s1082 = sadd.s32 %s1080, %s1081
      %s1083 = smul.addr %s1082, 8
      %s1084 = scalar_lea.vmem %s5, %s1083
      // Predicated region
      $region41: #{model_forward.1} parent=39 // pred_check
        %p1085 = pneg %p160
      $region42: #{model_forward.1} parent=39 // pred_check_branch
        %1087 = sbr.rel (%p1085) target = $region44
      $region43: #{model_forward.1} parent=39 // pred_region
        %s1088 = smul.u32 10, %s21
      $region44: #{model_forward.1} parent=39 // pred_fallthru
        _
    $region40: #{model_forward.1} parent=5 // pred_fallthru
      _
    %p1089 = scmp.le.s32.totalorder 2, %s11
    // Predicated region
    $region45: #{model_forward.1} parent=5 // pred_check
      %p1090 = pneg %p1089
    $region46: #{model_forward.1} parent=5 // pred_check_branch
      %1092 = sbr.rel (%p1090) target = $region48
    $region47: #{model_forward.1} parent=5 // pred_region
      %s1093 = ssub.s32 %s11, 2
      // Predicated region
      $region49: #{model_forward.1} parent=47 // pred_check
        %p1094 = pneg %p166
      $region50: #{model_forward.1} parent=47 // pred_check_branch
        %1096 = sbr.rel (%p1094) target = $region52
      $region51: #{model_forward.1} parent=47 // pred_region
        %s1097 = smul.u32 10, %s23
        %p1098 = scmp.lt.s32.totalorder %s22, 1
        %s1099 = scalar_select %p1098, %s22, 1
        %p1100 = scmp.lt.s32.totalorder %s1097, 9
        %s1101 = scalar_select %p1100, %s1097, 9
        %s1102 = smul.addr %s1099, 10
        %s1103 = sadd.s32 %s1101, %s1102
        %s1104 = smul.addr %s1103, 8
        %s1105 = scalar_lea.vmem %s5, %s1104
      $region52: #{model_forward.1} parent=47 // pred_fallthru
        _
    $region48: #{model_forward.1} parent=5 // pred_fallthru
      _
  $region6: #{model_forward.1} parent=0 // loop_footer
    %s15 = sadd.s32 1, %s11
  $region7: #{model_forward.1} parent=0 // loop_footer_branch
    %10 = sbr.rel target = $region3
  $region8: #{model_forward.1} parent=0 // loop_exit
    _

</llo_original>
